<compile_context>
chip_gen: v7x
topology: tpu7x:2x2x1
jax: 0.10.0
libtpu: 0.0.40
codegen_flags: <defaults>
</compile_context>

<pallas_src>
import functools

import jax
import jax.numpy as jnp
from jax.experimental import pallas as pl
from jax.experimental.pallas import tpu as pltpu


def se_resnet_kernel(x_ref, wc_ref, bc_ref, w1_ref, b1_ref, w2_ref, b2_ref, o_ref,
                     *, batch_block, seq_len):
    Bb, L = batch_block, seq_len
    BL = Bb * L

    x = x_ref[...]                                                  # (Bb*L, C)

    # (1) 1x1 Conv1d == per-position linear, fused over ALL rows in one matmul.
    #     wc_ref holds Wc^T (C_in, C_out); bc_ref is (1, C) and broadcasts over sublanes.
    y = jnp.dot(x, wc_ref[...], preferred_element_type=jnp.float32) + bc_ref[...]

    # (2) Squeeze: per-sample mean over the L rows of each sample, computed as a
    #     tiny pooling matmul  m = P @ y  with P[b, r] = 1/L iff row r belongs to
    #     sample b (mean scale folded into P).  Keeps everything 2-D (no in-kernel
    #     reshape) and the reduction rides the MXU.
    col = jax.lax.broadcasted_iota(jnp.int32, (Bb, BL), 1)           # row index r
    grp = jax.lax.broadcasted_iota(jnp.int32, (Bb, BL), 0)           # sample index b
    in_grp = (col >= grp * L) & (col < (grp + 1) * L)
    pool = jnp.where(in_grp, jnp.float32(1.0 / L), jnp.float32(0.0))
    m = jnp.dot(pool, y, preferred_element_type=jnp.float32)         # (Bb, C)

    # (3) Excitation MLP, batched across the Bb samples (single pair of matmuls
    #     instead of per-sample M=1 dots).
    h = jnp.dot(m, w1_ref[...], preferred_element_type=jnp.float32) + b1_ref[...]
    h = jnp.maximum(h, 0.0)
    s = jnp.dot(h, w2_ref[...], preferred_element_type=jnp.float32) + b2_ref[...]
    s = jax.nn.sigmoid(s)                                            # (Bb, C)

    # (4) Expand the per-sample gate back to all rows (expand = pool^T with unit
    #     weights, rebuilt from iotas to avoid an in-kernel transpose) and apply
    #     channel gating.  No residual add — the PyTorch module omits it despite
    #     its name.
    rowE = jax.lax.broadcasted_iota(jnp.int32, (BL, Bb), 0)
    grpE = jax.lax.broadcasted_iota(jnp.int32, (BL, Bb), 1)
    in_grpE = (rowE >= grpE * L) & (rowE < (grpE + 1) * L)
    expand = jnp.where(in_grpE, jnp.float32(1.0), jnp.float32(0.0))
    s_rows = jnp.dot(expand, s, preferred_element_type=jnp.float32)  # (Bb*L, C)

    o_ref[...] = (y * s_rows).astype(o_ref.dtype)


def se_resnet_forward(x, wc_t, bc, w1_t, b1, w2_t, b2, *, num_b_blocks=1):
    """x: (B, L, C) float32 (batch, seq, channels).  Returns (B, L, C)."""
    B, L, C = x.shape
    Ch = w1_t.shape[1]
    if B % num_b_blocks != 0:
        raise ValueError("B must be divisible by num_b_blocks")
    Bb = B // num_b_blocks
    if num_b_blocks > 1 and (Bb * L) % 8 != 0:
        raise ValueError("per-block row count must be a multiple of 8 when tiling the batch")

    # Free HBM-side flattening: (B, L, C) and (B*L, C) share the same row-major
    # layout, and it lets the kernel do the conv as one big matmul.
    x2 = x.reshape(B * L, C)

    kernel = functools.partial(se_resnet_kernel, batch_block=Bb, seq_len=L)

    # Weights/biases use constant index maps (whole array resident each step);
    # with a constant block index they are DMA'd once and not re-staged across
    # grid steps when num_b_blocks > 1.
    full = lambda shape: pl.BlockSpec(shape, lambda i: (0,) * len(shape))

    out2 = pl.pallas_call(
        kernel,
        out_shape=jax.ShapeDtypeStruct((B * L, C), x.dtype),
        grid_spec=pltpu.PrefetchScalarGridSpec(
            num_scalar_prefetch=0,
            grid=(num_b_blocks,),
            in_specs=[
                pl.BlockSpec((Bb * L, C), lambda i: (i, 0)),   # x rows of this batch block
                full((C, C)),                                  # Wc^T
                full((1, C)),                                  # bc
                full((C, Ch)),                                 # W1^T
                full((1, Ch)),                                 # b1
                full((Ch, C)),                                 # W2^T
                full((1, C)),                                  # b2
            ],
            out_specs=pl.BlockSpec((Bb * L, C), lambda i: (i, 0)),
        ),
        compiler_params=pltpu.CompilerParams(
            dimension_semantics=("parallel",),        # batch blocks are independent
            vmem_limit_bytes=32 * 1024 * 1024,        # safe on v5e/v6e/v7x; tiny usage here
        ),
    )(x2, wc_t, bc, w1_t, b1, w2_t, b2)

    return out2.reshape(B, L, C)


def se_resnet_reference(x, wc_t, bc, w1_t, b1, w2_t, b2):
    # Pure-JAX reference mirroring the PyTorch forward in (B, L, C) layout.
    y = jnp.einsum("blc,cd->bld", x, wc_t) + bc          # Conv1d k=1
    m = y.mean(axis=1)                                   # (B, C)
    h = jnp.maximum(m @ w1_t + b1, 0.0)                  # (B, C//2)
    s = jax.nn.sigmoid(h @ w2_t + b2)                    # (B, C)
    return y * s[:, None, :]


def _init_params(key, C):
    Ch = C // 2
    ks = jax.random.split(key, 6)
    wc = jax.random.normal(ks[0], (C, C), jnp.float32) * 0.1    # Conv1d weight (C_out, C_in)
    bc = jax.random.normal(ks[1], (C,), jnp.float32) * 0.1
    w1 = jax.random.normal(ks[2], (Ch, C), jnp.float32) * 0.1   # Linear(C, C//2) weight
    b1 = jax.random.normal(ks[3], (Ch,), jnp.float32) * 0.1
    w2 = jax.random.normal(ks[4], (C, Ch), jnp.float32) * 0.1   # Linear(C//2, C) weight
    b2 = jax.random.normal(ks[5], (C,), jnp.float32) * 0.1
    # Kernel and reference take (in, out)-transposed weights and 2-D biases.
    return wc.T, bc[None, :], w1.T, b1[None, :], w2.T, b2[None, :]


def _run_case(key, B, L, C, num_b_blocks=1):
    kx, kp = jax.random.split(key)
    x = jax.random.normal(kx, (B, L, C), dtype=jnp.float32)
    params = _init_params(kp, C)
    out = jax.block_until_ready(se_resnet_forward(x, *params, num_b_blocks=num_b_blocks))
    ref = se_resnet_reference(x, *params)
    assert out.shape == (B, L, C)
    assert jnp.allclose(out, ref, atol=1e-4, rtol=1e-4), f"mismatch at B={B} L={L} C={C}"


if __name__ == "__main__":
    key = jax.random.PRNGKey(0)
    k1, k2, k3 = jax.random.split(key, 3)

    # Primary config: input_dim=128 -> lane-dense (full 128-lane) output stores
    # and K=N=128 MXU matmuls; whole batch fused into a single grid step.
    _run_case(k1, B=2, L=8, C=128)

    # Original toy config (input_dim=32).
    _run_case(k2, B=2, L=8, C=32)

    # Batch-split grid path (2 parallel steps, e.g. v7x megacore at larger B).
    _run_case(k3, B=4, L=8, C=128, num_b_blocks=2)

    print("KERNEL_OK")
</pallas_src>

<mosaic_0001>
module attributes {stable_mosaic.version = 11 : i64} {
  func.func @se_resnet_kernel(%arg0: i32, %arg1: memref<16x128xf32, #tpu.memory_space<vmem>>, %arg2: memref<128x128xf32, #tpu.memory_space<vmem>>, %arg3: memref<1x128xf32, #tpu.memory_space<vmem>>, %arg4: memref<128x64xf32, #tpu.memory_space<vmem>>, %arg5: memref<1x64xf32, #tpu.memory_space<vmem>>, %arg6: memref<64x128xf32, #tpu.memory_space<vmem>>, %arg7: memref<1x128xf32, #tpu.memory_space<vmem>>, %arg8: memref<16x128xf32, #tpu.memory_space<vmem>>) attributes {dimension_semantics = [#tpu.dimension_semantics<parallel>], iteration_bounds = array<i64: 1>, scalar_prefetch = 0 : i64, scratch_operands = 0 : i64, tpu.core_type = #tpu.core_type<tc>, window_params = [{transform_indices = @transform_0, window_bounds = array<i64: 16, 128>}, {pipeline_mode = #tpu.pipeline_mode<synchronous>, transform_indices = @transform_1, window_bounds = array<i64: 128, 128>}, {pipeline_mode = #tpu.pipeline_mode<synchronous>, transform_indices = @transform_2, window_bounds = array<i64: 1, 128>}, {pipeline_mode = #tpu.pipeline_mode<synchronous>, transform_indices = @transform_3, window_bounds = array<i64: 128, 64>}, {pipeline_mode = #tpu.pipeline_mode<synchronous>, transform_indices = @transform_4, window_bounds = array<i64: 1, 64>}, {pipeline_mode = #tpu.pipeline_mode<synchronous>, transform_indices = @transform_5, window_bounds = array<i64: 64, 128>}, {pipeline_mode = #tpu.pipeline_mode<synchronous>, transform_indices = @transform_6, window_bounds = array<i64: 1, 128>}, {transform_indices = @transform_7, window_bounds = array<i64: 16, 128>}]} {
    %c0 = arith.constant 0 : index
    %c0_0 = arith.constant 0 : index
    %0 = vector.load %arg1[%c0, %c0_0] : memref<16x128xf32, #tpu.memory_space<vmem>>, vector<16x128xf32>
    %c0_1 = arith.constant 0 : index
    %c0_2 = arith.constant 0 : index
    %1 = vector.load %arg2[%c0_1, %c0_2] : memref<128x128xf32, #tpu.memory_space<vmem>>, vector<128x128xf32>
    %cst = arith.constant dense<0.000000e+00> : vector<16x128xf32>
    %2 = tpu.matmul %0, %1, %cst {dimension_numbers = #tpu.dot_dimension_numbers<[1], [0], [0], [1], [0, 0, 1, 1], [], []>} : vector<16x128xf32>, vector<128x128xf32>, vector<16x128xf32> -> vector<16x128xf32>
    %c0_3 = arith.constant 0 : index
    %c0_4 = arith.constant 0 : index
    %3 = vector.load %arg3[%c0_3, %c0_4] : memref<1x128xf32, #tpu.memory_space<vmem>>, vector<1x128xf32>
    %4 = vector.broadcast %3 : vector<1x128xf32> to vector<16x128xf32>
    %5 = arith.addf %2, %4 : vector<16x128xf32>
    %6 = tpu.iota {dimensions = array<i32: 1>} : vector<2x16xi32>
    %7 = tpu.iota {dimensions = array<i32: 0>} : vector<2x16xi32>
    %c8_i32 = arith.constant 8 : i32
    %8 = vector.broadcast %c8_i32 : i32 to vector<2x16xi32>
    %9 = arith.muli %7, %8 : vector<2x16xi32>
    %10 = arith.cmpi sge, %6, %9 : vector<2x16xi32>
    %c1_i32 = arith.constant 1 : i32
    %11 = vector.broadcast %c1_i32 : i32 to vector<2x16xi32>
    %12 = arith.addi %7, %11 : vector<2x16xi32>
    %c8_i32_5 = arith.constant 8 : i32
    %13 = vector.broadcast %c8_i32_5 : i32 to vector<2x16xi32>
    %14 = arith.muli %12, %13 : vector<2x16xi32>
    %15 = arith.cmpi slt, %6, %14 : vector<2x16xi32>
    %16 = arith.andi %10, %15 : vector<2x16xi1>
    %cst_6 = arith.constant 1.250000e-01 : f32
    %cst_7 = arith.constant 0.000000e+00 : f32
    %17 = vector.broadcast %cst_6 : f32 to vector<2x16xf32>
    %18 = vector.broadcast %cst_7 : f32 to vector<2x16xf32>
    %19 = arith.select %16, %17, %18 : vector<2x16xi1>, vector<2x16xf32>
    %cst_8 = arith.constant dense<0.000000e+00> : vector<2x128xf32>
    %20 = tpu.matmul %19, %5, %cst_8 {dimension_numbers = #tpu.dot_dimension_numbers<[1], [0], [0], [1], [0, 0, 1, 1], [], []>} : vector<2x16xf32>, vector<16x128xf32>, vector<2x128xf32> -> vector<2x128xf32>
    %c0_9 = arith.constant 0 : index
    %c0_10 = arith.constant 0 : index
    %21 = vector.load %arg4[%c0_9, %c0_10] : memref<128x64xf32, #tpu.memory_space<vmem>>, vector<128x64xf32>
    %cst_11 = arith.constant dense<0.000000e+00> : vector<2x64xf32>
    %22 = tpu.matmul %20, %21, %cst_11 {dimension_numbers = #tpu.dot_dimension_numbers<[1], [0], [0], [1], [0, 0, 1, 1], [], []>} : vector<2x128xf32>, vector<128x64xf32>, vector<2x64xf32> -> vector<2x64xf32>
    %c0_12 = arith.constant 0 : index
    %c0_13 = arith.constant 0 : index
    %23 = vector.load %arg5[%c0_12, %c0_13] : memref<1x64xf32, #tpu.memory_space<vmem>>, vector<1x64xf32>
    %24 = vector.broadcast %23 : vector<1x64xf32> to vector<2x64xf32>
    %25 = arith.addf %22, %24 : vector<2x64xf32>
    %cst_14 = arith.constant 0.000000e+00 : f32
    %26 = vector.broadcast %cst_14 : f32 to vector<2x64xf32>
    %27 = arith.maximumf %25, %26 : vector<2x64xf32>
    %c0_15 = arith.constant 0 : index
    %c0_16 = arith.constant 0 : index
    %28 = vector.load %arg6[%c0_15, %c0_16] : memref<64x128xf32, #tpu.memory_space<vmem>>, vector<64x128xf32>
    %cst_17 = arith.constant dense<0.000000e+00> : vector<2x128xf32>
    %29 = tpu.matmul %27, %28, %cst_17 {dimension_numbers = #tpu.dot_dimension_numbers<[1], [0], [0], [1], [0, 0, 1, 1], [], []>} : vector<2x64xf32>, vector<64x128xf32>, vector<2x128xf32> -> vector<2x128xf32>
    %c0_18 = arith.constant 0 : index
    %c0_19 = arith.constant 0 : index
    %30 = vector.load %arg7[%c0_18, %c0_19] : memref<1x128xf32, #tpu.memory_space<vmem>>, vector<1x128xf32>
    %31 = vector.broadcast %30 : vector<1x128xf32> to vector<2x128xf32>
    %32 = arith.addf %29, %31 : vector<2x128xf32>
    %33 = arith.negf %32 : vector<2x128xf32>
    %34 = math.exp %33 : vector<2x128xf32>
    %cst_20 = arith.constant 1.000000e+00 : f32
    %35 = vector.broadcast %cst_20 : f32 to vector<2x128xf32>
    %36 = arith.addf %35, %34 : vector<2x128xf32>
    %37 = arith.divf %35, %36 : vector<2x128xf32>
    %38 = tpu.iota {dimensions = array<i32: 0>} : vector<16x2xi32>
    %39 = tpu.iota {dimensions = array<i32: 1>} : vector<16x2xi32>
    %c8_i32_21 = arith.constant 8 : i32
    %40 = vector.broadcast %c8_i32_21 : i32 to vector<16x2xi32>
    %41 = arith.muli %39, %40 : vector<16x2xi32>
    %42 = arith.cmpi sge, %38, %41 : vector<16x2xi32>
    %c1_i32_22 = arith.constant 1 : i32
    %43 = vector.broadcast %c1_i32_22 : i32 to vector<16x2xi32>
    %44 = arith.addi %39, %43 : vector<16x2xi32>
    %c8_i32_23 = arith.constant 8 : i32
    %45 = vector.broadcast %c8_i32_23 : i32 to vector<16x2xi32>
    %46 = arith.muli %44, %45 : vector<16x2xi32>
    %47 = arith.cmpi slt, %38, %46 : vector<16x2xi32>
    %48 = arith.andi %42, %47 : vector<16x2xi1>
    %cst_24 = arith.constant 1.000000e+00 : f32
    %cst_25 = arith.constant 0.000000e+00 : f32
    %49 = vector.broadcast %cst_24 : f32 to vector<16x2xf32>
    %50 = vector.broadcast %cst_25 : f32 to vector<16x2xf32>
    %51 = arith.select %48, %49, %50 : vector<16x2xi1>, vector<16x2xf32>
    %cst_26 = arith.constant dense<0.000000e+00> : vector<16x128xf32>
    %52 = tpu.matmul %51, %37, %cst_26 {dimension_numbers = #tpu.dot_dimension_numbers<[1], [0], [0], [1], [0, 0, 1, 1], [], []>} : vector<16x2xf32>, vector<2x128xf32>, vector<16x128xf32> -> vector<16x128xf32>
    %53 = arith.mulf %5, %52 : vector<16x128xf32>
    %c0_27 = arith.constant 0 : index
    %c0_28 = arith.constant 0 : index
    %54 = vector.load %arg8[%c0_27, %c0_28] : memref<16x128xf32, #tpu.memory_space<vmem>>, vector<16x128xf32>
    tpu.vector_store %arg8[%c0_27, %c0_28], %53 {strides = array<i32>} : memref<16x128xf32, #tpu.memory_space<vmem>>, vector<16x128xf32>,
    return
  }
  func.func @transform_0(%arg0: i32) -> (i32, i32) {
    %c0_i32 = arith.constant 0 : i32
    %c0_i32_0 = arith.constant 0 : i32
    return %arg0, %c0_i32 : i32, i32
  }
  func.func @transform_1(%arg0: i32) -> (i32, i32) {
    %c0_i32 = arith.constant 0 : i32
    %c0_i32_0 = arith.constant 0 : i32
    %c0_i32_1 = arith.constant 0 : i32
    return %c0_i32, %c0_i32_0 : i32, i32
  }
  func.func @transform_2(%arg0: i32) -> (i32, i32) {
    %c0_i32 = arith.constant 0 : i32
    %c0_i32_0 = arith.constant 0 : i32
    %c0_i32_1 = arith.constant 0 : i32
    return %c0_i32, %c0_i32_0 : i32, i32
  }
  func.func @transform_3(%arg0: i32) -> (i32, i32) {
    %c0_i32 = arith.constant 0 : i32
    %c0_i32_0 = arith.constant 0 : i32
    %c0_i32_1 = arith.constant 0 : i32
    return %c0_i32, %c0_i32_0 : i32, i32
  }
  func.func @transform_4(%arg0: i32) -> (i32, i32) {
    %c0_i32 = arith.constant 0 : i32
    %c0_i32_0 = arith.constant 0 : i32
    %c0_i32_1 = arith.constant 0 : i32
    return %c0_i32, %c0_i32_0 : i32, i32
  }
  func.func @transform_5(%arg0: i32) -> (i32, i32) {
    %c0_i32 = arith.constant 0 : i32
    %c0_i32_0 = arith.constant 0 : i32
    %c0_i32_1 = arith.constant 0 : i32
    return %c0_i32, %c0_i32_0 : i32, i32
  }
  func.func @transform_6(%arg0: i32) -> (i32, i32) {
    %c0_i32 = arith.constant 0 : i32
    %c0_i32_0 = arith.constant 0 : i32
    %c0_i32_1 = arith.constant 0 : i32
    return %c0_i32, %c0_i32_0 : i32, i32
  }
  func.func @transform_7(%arg0: i32) -> (i32, i32) {
    %c0_i32 = arith.constant 0 : i32
    %c0_i32_0 = arith.constant 0 : i32
    return %arg0, %c0_i32 : i32, i32
  }
}

</mosaic_0001>

<llo_original>
// kernel: tpu_custom_call.1
$region0: #{tpu_custom_call.1}
  #allocation0 [shape = 'u32[]', space=smem, size = 0x4, offset = 0x4, fixed_abs, tag = 'smem constant byte address 0x4 - core index']
  #allocation1 [shape = 'u32[144,128]{1,0:T(1,128)}', space=vmem, size = 0x12000, scoped, tag = 'internal scratch']
  %s0 = inlined_call_operand.hbm [shape: f32[16,128], index: 0, kind: input, shape index: {}]
  %s1 = inlined_call_operand.vmem [shape: f32[128,128], index: 1, kind: input, shape index: {}]
  %s2 = inlined_call_operand.vmem [shape: f32[1,128], index: 2, kind: input, shape index: {}]
  %s3 = inlined_call_operand.vmem [shape: f32[128,64], index: 3, kind: input, shape index: {}]
  %s4 = inlined_call_operand.vmem [shape: f32[1,64], index: 4, kind: input, shape index: {}]
  %s5 = inlined_call_operand.vmem [shape: f32[64,128], index: 5, kind: input, shape index: {}]
  %s6 = inlined_call_operand.vmem [shape: f32[1,128], index: 6, kind: input, shape index: {}]
  %s7 = inlined_call_operand.hbm [shape: f32[16,128], index: 7, kind: output, shape index: {}]
  %s8 = sld [smem:[#allocation0]]
  $region42: #{tpu_custom_call.1} parent=0
    _
  %s10 = ssub.s32 1, %s8
  %s11 = scalar_select 0, %s10, %s8
  $region1: #{tpu_custom_call.1} parent=0
    #allocation2 [shape = 'u8[8192]{0}', space=vmem, size = 0x2000, scoped, tag = 'input window, operand 0, single buffered']
    #allocation3 [shape = 's32[1]{0}', space=sflag, size = 0x4, scoped, tag = 'scoped memory for tpu_custom_call.1']
    #allocation4 [shape = 's32[1]{0}', space=sflag, size = 0x4, scoped, tag = 'scoped memory for tpu_custom_call.1']
    #allocation5 [shape = 'u8[8192]{0}', space=vmem, size = 0x2000, scoped, tag = 'output window, operand 0, single buffered']
    %12 = vsyncpa [#allocation3], 0
    %13 = vsyncpa [#allocation4], 0
    // Predicated region
    $region2: #{tpu_custom_call.1} parent=1 // pred_check
      _
    $region3: #{tpu_custom_call.1} parent=1 // pred_check_branch
      %15 = sbr.rel (0) target = $region5
    $region4: #{tpu_custom_call.1} parent=1 // pred_region
      %s17 = ssub.s32 256, 256
      %18 = vsyncadd [#allocation3], %s17
      %s19 = sshll.u32 [#allocation2], 4
      %s20 = int_to_ptr.vmem [resolvable:$true] %s19
      %25 = dma.hbm_to_vmem [thread:$0]  %s0, 256, %s20, [#allocation3], 128, 128, 8
    $region5: #{tpu_custom_call.1} parent=1 // pred_fallthru
      _
    // Predicated region
    $region6: #{tpu_custom_call.1} parent=1 // pred_check
      _
    $region7: #{tpu_custom_call.1} parent=1 // pred_check_branch
      %27 = sbr.rel (0) target = $region9
    $region8: #{tpu_custom_call.1} parent=1 // pred_region
      _
    $region9: #{tpu_custom_call.1} parent=1 // pred_fallthru
      _
    // Predicated region
    $region10: #{tpu_custom_call.1} parent=1 // pred_check
      _
    $region11: #{tpu_custom_call.1} parent=1 // pred_check_branch
      %29 = sbr.rel (0) target = $region13
    $region12: #{tpu_custom_call.1} parent=1 // pred_region
      _
    $region13: #{tpu_custom_call.1} parent=1 // pred_fallthru
      _
    // Predicated region
    $region14: #{tpu_custom_call.1} parent=1 // pred_check
      _
    $region15: #{tpu_custom_call.1} parent=1 // pred_check_branch
      %31 = sbr.rel (0) target = $region17
    $region16: #{tpu_custom_call.1} parent=1 // pred_region
      _
    $region17: #{tpu_custom_call.1} parent=1 // pred_fallthru
      _
    // Predicated region
    $region18: #{tpu_custom_call.1} parent=1 // pred_check
      _
    $region19: #{tpu_custom_call.1} parent=1 // pred_check_branch
      %33 = sbr.rel (0) target = $region21
    $region20: #{tpu_custom_call.1} parent=1 // pred_region
      _
    $region21: #{tpu_custom_call.1} parent=1 // pred_fallthru
      _
    // Predicated region
    $region22: #{tpu_custom_call.1} parent=1 // pred_check
      _
    $region23: #{tpu_custom_call.1} parent=1 // pred_check_branch
      %35 = sbr.rel (0) target = $region25
    $region24: #{tpu_custom_call.1} parent=1 // pred_region
      _
    $region25: #{tpu_custom_call.1} parent=1 // pred_fallthru
      _
    // Predicated region
    $region26: #{tpu_custom_call.1} parent=1 // pred_check
      _
    $region27: #{tpu_custom_call.1} parent=1 // pred_check_branch
      %37 = sbr.rel (0) target = $region29
    $region28: #{tpu_custom_call.1} parent=1 // pred_region
      _
    $region29: #{tpu_custom_call.1} parent=1 // pred_fallthru
      _
    // Predicated region
    $region30: #{tpu_custom_call.1} parent=1 // pred_check
      _
    $region31: #{tpu_custom_call.1} parent=1 // pred_check_branch
      %39 = sbr.rel (0) target = $region33
    $region32: #{tpu_custom_call.1} parent=1 // pred_region
      %40 = dma.done [#allocation3], 256
    $region33: #{tpu_custom_call.1} parent=1 // pred_fallthru
      _
    %v41 = vld [vmem:[#allocation2] sm:$0xff]
    %v42 = vld [vmem:[#allocation2 + $0x8] sm:$0xff]
    %v43 = vld [vmem:[%s1] sm:$0xff]
    %v44 = vld [vmem:[%s1 + $0x8] sm:$0xff]
    %v45 = vld [vmem:[%s1 + $0x10] sm:$0xff]
    %v46 = vld [vmem:[%s1 + $0x18] sm:$0xff]
    %v47 = vld [vmem:[%s1 + $0x20] sm:$0xff]
    %v48 = vld [vmem:[%s1 + $0x28] sm:$0xff]
    %v49 = vld [vmem:[%s1 + $0x30] sm:$0xff]
    %v50 = vld [vmem:[%s1 + $0x38] sm:$0xff]
    %v51 = vld [vmem:[%s1 + $0x40] sm:$0xff]
    %v52 = vld [vmem:[%s1 + $0x48] sm:$0xff]
    %v53 = vld [vmem:[%s1 + $0x50] sm:$0xff]
    %v54 = vld [vmem:[%s1 + $0x58] sm:$0xff]
    %v55 = vld [vmem:[%s1 + $0x60] sm:$0xff]
    %v56 = vld [vmem:[%s1 + $0x68] sm:$0xff]
    %v57 = vld [vmem:[%s1 + $0x70] sm:$0xff]
    %v58 = vld [vmem:[%s1 + $0x78] sm:$0xff]
    %v59 = vld [vmem:[%s2] sm:$0x1]
    %v61 = vlaneseq
    %v62 = vshrl.u32 %v61, 7
    %v63 = vsub.s32 0, %v62
    %v64 = vrot.slane %v59, %v63
    %66 = vmatprep.subr.mxu0 0.0
    %67 = vmatpush1.msra.mxu0 %v43
    %68 = vmatprep.subr.mxu0 0.0
    %69 = vmatpush1.msra.mxu0 %v44
    %70 = vmatprep.subr.mxu0 0.0
    %71 = vmatpush1.msra.mxu0 %v45
    %72 = vmatprep.subr.mxu0 0.0
    %73 = vmatpush1.msra.mxu0 %v46
    %74 = vmatprep.subr.mxu0 0.0
    %75 = vmatpush1.msra.mxu0 %v47
    %76 = vmatprep.subr.mxu0 0.0
    %77 = vmatpush1.msra.mxu0 %v48
    %78 = vmatprep.subr.mxu0 0.0
    %79 = vmatpush1.msra.mxu0 %v49
    %80 = vmatprep.subr.mxu0 0.0
    %81 = vmatpush1.msra.mxu0 %v50
    %82 = vmatprep.subr.mxu0 0.0
    %83 = vmatpush1.msra.mxu0 %v51
    %84 = vmatprep.subr.mxu0 0.0
    %85 = vmatpush1.msra.mxu0 %v52
    %86 = vmatprep.subr.mxu0 0.0
    %87 = vmatpush1.msra.mxu0 %v53
    %88 = vmatprep.subr.mxu0 0.0
    %89 = vmatpush1.msra.mxu0 %v54
    %90 = vmatprep.subr.mxu0 0.0
    %91 = vmatpush1.msra.mxu0 %v55
    %92 = vmatprep.subr.mxu0 0.0
    %93 = vmatpush1.msra.mxu0 %v56
    %94 = vmatprep.subr.mxu0 0.0
    %95 = vmatpush1.msra.mxu0 %v57
    %96 = vmatprep.subr.mxu0 0.0
    %97 = vmatpush1.msra.mxu0 %v58
    %98 = vmatprep.subr.mxu0 0.0
    %99 = vmatpush1.msra.mxu0 0.0
    %100 = vmatprep.subr.mxu0 0.0
    %101 = vmatpush1.msra.mxu0 0.0
    %102 = vmatprep.subr.mxu0 0.0
    %103 = vmatpush1.msra.mxu0 0.0
    %104 = vmatprep.subr.mxu0 0.0
    %105 = vmatpush1.msra.mxu0 0.0
    %106 = vmatprep.subr.mxu0 0.0
    %107 = vmatpush1.msra.mxu0 0.0
    %108 = vmatprep.subr.mxu0 0.0
    %109 = vmatpush1.msra.mxu0 0.0
    %110 = vmatprep.subr.mxu0 0.0
    %111 = vmatpush1.msra.mxu0 0.0
    %112 = vmatprep.subr.mxu0 0.0
    %113 = vmatpush1.msra.mxu0 0.0
    %114 = vmatprep.subr.mxu0 0.0
    %115 = vmatpush1.msra.mxu0 0.0
    %116 = vmatprep.subr.mxu0 0.0
    %117 = vmatpush1.msra.mxu0 0.0
    %118 = vmatprep.subr.mxu0 0.0
    %119 = vmatpush1.msra.mxu0 0.0
    %120 = vmatprep.subr.mxu0 0.0
    %121 = vmatpush1.msra.mxu0 0.0
    %122 = vmatprep.subr.mxu0 0.0
    %123 = vmatpush1.msra.mxu0 0.0
    %124 = vmatprep.subr.mxu0 0.0
    %125 = vmatpush1.msra.mxu0 0.0
    %126 = vmatprep.subr.mxu0 0.0
    %127 = vmatpush1.msra.mxu0 0.0
    %128 = vmatprep.subr.mxu0 0.0
    %129 = vmatpush1.msra.mxu0 0.0
    %130 = vmatprep.mubr.f32.mxu0 0.0
    %131 = vmatmul.mubr.f32.gmra.mrb[0].mxu0 %v41
    %v132 = vpop.f32.mrb[0].mxu0
    %v133 = vadd.f32 %v64, %v132
    %v134 = vpop.f32.mrb[0].mxu0
    %135 = vmatprep.mubr.f32.mxu0 0.0
    %136 = vmatmul.mubr.f32.gmra.mrb[0].mxu0 %v42
    %v137 = vpop.f32.mrb[0].mxu0
    %v138 = vadd.f32 %v64, %v137
    %v139 = vpop.f32.mrb[0].mxu0
    %140 = vdwg.mxu0
    %v141 = vlaneseq
    %v142 = vand.u32 %v141, 127
    %v143 = vlaneseq
    %v144 = vshrl.u32 %v143, 7
    %v145 = vmul.u32 %v144, 8
    %vm146 = vcmp.ge.s32.totalorder %v142, %v145
    %v147 = vadd.s32 %v144, 1
    %v148 = vmul.u32 %v147, 8
    %vm149 = vcmp.lt.s32.totalorder %v142, %v148
    %vm150 = vmand %vm146, %vm149
    %v151 = vsel %vm150, 0.125, 0.0
    %vm152 = vcmask 130048
    %v154 = vsel %vm152, %v151, 0
    %156 = vmatprep.subr.mxu0 0.0
    %157 = vmatpush1.msra.mxu0 %v133
    %158 = vmatprep.subr.mxu0 0.0
    %159 = vmatpush1.msra.mxu0 %v138
    %160 = vmatprep.subr.mxu0 0.0
    %161 = vmatpush1.msra.mxu0 0.0
    %162 = vmatprep.subr.mxu0 0.0
    %163 = vmatpush1.msra.mxu0 0.0
    %164 = vmatprep.subr.mxu0 0.0
    %165 = vmatpush1.msra.mxu0 0.0
    %166 = vmatprep.subr.mxu0 0.0
    %167 = vmatpush1.msra.mxu0 0.0
    %168 = vmatprep.subr.mxu0 0.0
    %169 = vmatpush1.msra.mxu0 0.0
    %170 = vmatprep.subr.mxu0 0.0
    %171 = vmatpush1.msra.mxu0 0.0
    %172 = vmatprep.subr.mxu0 0.0
    %173 = vmatpush1.msra.mxu0 0.0
    %174 = vmatprep.subr.mxu0 0.0
    %175 = vmatpush1.msra.mxu0 0.0
    %176 = vmatprep.subr.mxu0 0.0
    %177 = vmatpush1.msra.mxu0 0.0
    %178 = vmatprep.subr.mxu0 0.0
    %179 = vmatpush1.msra.mxu0 0.0
    %180 = vmatprep.subr.mxu0 0.0
    %181 = vmatpush1.msra.mxu0 0.0
    %182 = vmatprep.subr.mxu0 0.0
    %183 = vmatpush1.msra.mxu0 0.0
    %184 = vmatprep.subr.mxu0 0.0
    %185 = vmatpush1.msra.mxu0 0.0
    %186 = vmatprep.subr.mxu0 0.0
    %187 = vmatpush1.msra.mxu0 0.0
    %188 = vmatprep.subr.mxu0 0.0
    %189 = vmatpush1.msra.mxu0 0.0
    %190 = vmatprep.subr.mxu0 0.0
    %191 = vmatpush1.msra.mxu0 0.0
    %192 = vmatprep.subr.mxu0 0.0
    %193 = vmatpush1.msra.mxu0 0.0
    %194 = vmatprep.subr.mxu0 0.0
    %195 = vmatpush1.msra.mxu0 0.0
    %196 = vmatprep.subr.mxu0 0.0
    %197 = vmatpush1.msra.mxu0 0.0
    %198 = vmatprep.subr.mxu0 0.0
    %199 = vmatpush1.msra.mxu0 0.0
    %200 = vmatprep.subr.mxu0 0.0
    %201 = vmatpush1.msra.mxu0 0.0
    %202 = vmatprep.subr.mxu0 0.0
    %203 = vmatpush1.msra.mxu0 0.0
    %204 = vmatprep.subr.mxu0 0.0
    %205 = vmatpush1.msra.mxu0 0.0
    %206 = vmatprep.subr.mxu0 0.0
    %207 = vmatpush1.msra.mxu0 0.0
    %208 = vmatprep.subr.mxu0 0.0
    %209 = vmatpush1.msra.mxu0 0.0
    %210 = vmatprep.subr.mxu0 0.0
    %211 = vmatpush1.msra.mxu0 0.0
    %212 = vmatprep.subr.mxu0 0.0
    %213 = vmatpush1.msra.mxu0 0.0
    %214 = vmatprep.subr.mxu0 0.0
    %215 = vmatpush1.msra.mxu0 0.0
    %216 = vmatprep.subr.mxu0 0.0
    %217 = vmatpush1.msra.mxu0 0.0
    %218 = vmatprep.subr.mxu0 0.0
    %219 = vmatpush1.msra.mxu0 0.0
    %220 = vmatprep.mubr.f32.mxu0 0.0
    %221 = vmatmul.mubr.f32.gmra.mrb[0].mxu0 %v154
    %v222 = vpop.f32.mrb[0].mxu0
    %v223 = vadd.f32 0.0, %v222
    %v224 = vpop.f32.mrb[0].mxu0
    %225 = vdwg.mxu0
    %v226 = vld [vmem:[%s3] sm:$0xff]
    %v227 = vld [vmem:[%s3 + $0x8] sm:$0xff]
    %v228 = vld [vmem:[%s3 + $0x10] sm:$0xff]
    %v229 = vld [vmem:[%s3 + $0x18] sm:$0xff]
    %v230 = vld [vmem:[%s3 + $0x20] sm:$0xff]
    %v231 = vld [vmem:[%s3 + $0x28] sm:$0xff]
    %v232 = vld [vmem:[%s3 + $0x30] sm:$0xff]
    %v233 = vld [vmem:[%s3 + $0x38] sm:$0xff]
    %v234 = vld [vmem:[%s3 + $0x40] sm:$0xff]
    %v235 = vld [vmem:[%s3 + $0x48] sm:$0xff]
    %v236 = vld [vmem:[%s3 + $0x50] sm:$0xff]
    %v237 = vld [vmem:[%s3 + $0x58] sm:$0xff]
    %v238 = vld [vmem:[%s3 + $0x60] sm:$0xff]
    %v239 = vld [vmem:[%s3 + $0x68] sm:$0xff]
    %v240 = vld [vmem:[%s3 + $0x70] sm:$0xff]
    %v241 = vld [vmem:[%s3 + $0x78] sm:$0xff]
    %v242 = vld [vmem:[%s4] sm:$0x1]
    %v244 = vlaneseq
    %v245 = vshrl.u32 %v244, 7
    %v246 = vsub.s32 0, %v245
    %v247 = vrot.slane %v242, %v246
    %249 = vmatprep.subr.mxu0 0.0
    %250 = vmatpush1.msra.mxu0 %v226
    %251 = vmatprep.subr.mxu0 0.0
    %252 = vmatpush1.msra.mxu0 %v227
    %253 = vmatprep.subr.mxu0 0.0
    %254 = vmatpush1.msra.mxu0 %v228
    %255 = vmatprep.subr.mxu0 0.0
    %256 = vmatpush1.msra.mxu0 %v229
    %257 = vmatprep.subr.mxu0 0.0
    %258 = vmatpush1.msra.mxu0 %v230
    %259 = vmatprep.subr.mxu0 0.0
    %260 = vmatpush1.msra.mxu0 %v231
    %261 = vmatprep.subr.mxu0 0.0
    %262 = vmatpush1.msra.mxu0 %v232
    %263 = vmatprep.subr.mxu0 0.0
    %264 = vmatpush1.msra.mxu0 %v233
    %265 = vmatprep.subr.mxu0 0.0
    %266 = vmatpush1.msra.mxu0 %v234
    %267 = vmatprep.subr.mxu0 0.0
    %268 = vmatpush1.msra.mxu0 %v235
    %269 = vmatprep.subr.mxu0 0.0
    %270 = vmatpush1.msra.mxu0 %v236
    %271 = vmatprep.subr.mxu0 0.0
    %272 = vmatpush1.msra.mxu0 %v237
    %273 = vmatprep.subr.mxu0 0.0
    %274 = vmatpush1.msra.mxu0 %v238
    %275 = vmatprep.subr.mxu0 0.0
    %276 = vmatpush1.msra.mxu0 %v239
    %277 = vmatprep.subr.mxu0 0.0
    %278 = vmatpush1.msra.mxu0 %v240
    %279 = vmatprep.subr.mxu0 0.0
    %280 = vmatpush1.msra.mxu0 %v241
    %281 = vmatprep.subr.mxu0 0.0
    %282 = vmatpush1.msra.mxu0 0.0
    %283 = vmatprep.subr.mxu0 0.0
    %284 = vmatpush1.msra.mxu0 0.0
    %285 = vmatprep.subr.mxu0 0.0
    %286 = vmatpush1.msra.mxu0 0.0
    %287 = vmatprep.subr.mxu0 0.0
    %288 = vmatpush1.msra.mxu0 0.0
    %289 = vmatprep.subr.mxu0 0.0
    %290 = vmatpush1.msra.mxu0 0.0
    %291 = vmatprep.subr.mxu0 0.0
    %292 = vmatpush1.msra.mxu0 0.0
    %293 = vmatprep.subr.mxu0 0.0
    %294 = vmatpush1.msra.mxu0 0.0
    %295 = vmatprep.subr.mxu0 0.0
    %296 = vmatpush1.msra.mxu0 0.0
    %297 = vmatprep.subr.mxu0 0.0
    %298 = vmatpush1.msra.mxu0 0.0
    %299 = vmatprep.subr.mxu0 0.0
    %300 = vmatpush1.msra.mxu0 0.0
    %301 = vmatprep.subr.mxu0 0.0
    %302 = vmatpush1.msra.mxu0 0.0
    %303 = vmatprep.subr.mxu0 0.0
    %304 = vmatpush1.msra.mxu0 0.0
    %305 = vmatprep.subr.mxu0 0.0
    %306 = vmatpush1.msra.mxu0 0.0
    %307 = vmatprep.subr.mxu0 0.0
    %308 = vmatpush1.msra.mxu0 0.0
    %309 = vmatprep.subr.mxu0 0.0
    %310 = vmatpush1.msra.mxu0 0.0
    %311 = vmatprep.subr.mxu0 0.0
    %312 = vmatpush1.msra.mxu0 0.0
    %313 = vmatprep.mubr.f32.mxu0 0.0
    %314 = vmatmul.mubr.f32.gmra.mrb[0].mxu0 %v223
    %v315 = vpop.f32.mrb[0].mxu0
    %v316 = vadd.f32 %v247, %v315
    %v317 = vpop.f32.mrb[0].mxu0
    %318 = vdwg.mxu0
    %v319 = vmax.f32 %v316, 0.0
    %v320 = vld [vmem:[%s5] sm:$0xff]
    %v321 = vld [vmem:[%s5 + $0x8] sm:$0xff]
    %v322 = vld [vmem:[%s5 + $0x10] sm:$0xff]
    %v323 = vld [vmem:[%s5 + $0x18] sm:$0xff]
    %v324 = vld [vmem:[%s5 + $0x20] sm:$0xff]
    %v325 = vld [vmem:[%s5 + $0x28] sm:$0xff]
    %v326 = vld [vmem:[%s5 + $0x30] sm:$0xff]
    %v327 = vld [vmem:[%s5 + $0x38] sm:$0xff]
    %v328 = vld [vmem:[%s6] sm:$0x1]
    %v330 = vlaneseq
    %v331 = vshrl.u32 %v330, 7
    %v332 = vsub.s32 0, %v331
    %v333 = vrot.slane %v328, %v332
    %vm335 = vcmask 523264
    %v337 = vsel %vm335, %v319, 0
    %339 = vmatprep.subr.mxu0 0.0
    %340 = vmatpush1.msra.mxu0 %v320
    %341 = vmatprep.subr.mxu0 0.0
    %342 = vmatpush1.msra.mxu0 %v321
    %343 = vmatprep.subr.mxu0 0.0
    %344 = vmatpush1.msra.mxu0 %v322
    %345 = vmatprep.subr.mxu0 0.0
    %346 = vmatpush1.msra.mxu0 %v323
    %347 = vmatprep.subr.mxu0 0.0
    %348 = vmatpush1.msra.mxu0 %v324
    %349 = vmatprep.subr.mxu0 0.0
    %350 = vmatpush1.msra.mxu0 %v325
    %351 = vmatprep.subr.mxu0 0.0
    %352 = vmatpush1.msra.mxu0 %v326
    %353 = vmatprep.subr.mxu0 0.0
    %354 = vmatpush1.msra.mxu0 %v327
    %355 = vmatprep.subr.mxu0 0.0
    %356 = vmatpush1.msra.mxu0 0.0
    %357 = vmatprep.subr.mxu0 0.0
    %358 = vmatpush1.msra.mxu0 0.0
    %359 = vmatprep.subr.mxu0 0.0
    %360 = vmatpush1.msra.mxu0 0.0
    %361 = vmatprep.subr.mxu0 0.0
    %362 = vmatpush1.msra.mxu0 0.0
    %363 = vmatprep.subr.mxu0 0.0
    %364 = vmatpush1.msra.mxu0 0.0
    %365 = vmatprep.subr.mxu0 0.0
    %366 = vmatpush1.msra.mxu0 0.0
    %367 = vmatprep.subr.mxu0 0.0
    %368 = vmatpush1.msra.mxu0 0.0
    %369 = vmatprep.subr.mxu0 0.0
    %370 = vmatpush1.msra.mxu0 0.0
    %371 = vmatprep.subr.mxu0 0.0
    %372 = vmatpush1.msra.mxu0 0.0
    %373 = vmatprep.subr.mxu0 0.0
    %374 = vmatpush1.msra.mxu0 0.0
    %375 = vmatprep.subr.mxu0 0.0
    %376 = vmatpush1.msra.mxu0 0.0
    %377 = vmatprep.subr.mxu0 0.0
    %378 = vmatpush1.msra.mxu0 0.0
    %379 = vmatprep.subr.mxu0 0.0
    %380 = vmatpush1.msra.mxu0 0.0
    %381 = vmatprep.subr.mxu0 0.0
    %382 = vmatpush1.msra.mxu0 0.0
    %383 = vmatprep.subr.mxu0 0.0
    %384 = vmatpush1.msra.mxu0 0.0
    %385 = vmatprep.subr.mxu0 0.0
    %386 = vmatpush1.msra.mxu0 0.0
    %387 = vmatprep.subr.mxu0 0.0
    %388 = vmatpush1.msra.mxu0 0.0
    %389 = vmatprep.subr.mxu0 0.0
    %390 = vmatpush1.msra.mxu0 0.0
    %391 = vmatprep.subr.mxu0 0.0
    %392 = vmatpush1.msra.mxu0 0.0
    %393 = vmatprep.subr.mxu0 0.0
    %394 = vmatpush1.msra.mxu0 0.0
    %395 = vmatprep.subr.mxu0 0.0
    %396 = vmatpush1.msra.mxu0 0.0
    %397 = vmatprep.subr.mxu0 0.0
    %398 = vmatpush1.msra.mxu0 0.0
    %399 = vmatprep.subr.mxu0 0.0
    %400 = vmatpush1.msra.mxu0 0.0
    %401 = vmatprep.subr.mxu0 0.0
    %402 = vmatpush1.msra.mxu0 0.0
    %403 = vmatprep.mubr.f32.mxu0 0.0
    %404 = vmatmul.mubr.f32.gmra.mrb[0].mxu0 %v337
    %v405 = vpop.f32.mrb[0].mxu0
    %v406 = vadd.f32 %v333, %v405
    %v407 = vpop.f32.mrb[0].mxu0
    %408 = vdwg.mxu0
    %v409 = vxor.u32 %v406, 2147483648
    %v410 = vmul.f32 %v409, 1.442695
    %v411 = vpow.pop %v410
    %v412 = vadd.f32 %v411, 1.0
    %v413 = vrcp.pop %v412
    %v414 = vmul.f32 1.0, %v413
    %v415 = vadd.s32 %v144, 8
    %v416 = vmul.u32 %v142, 8
    %vm417 = vcmp.ge.s32.totalorder %v144, %v416
    %vm418 = vcmp.ge.s32.totalorder %v415, %v416
    %v419 = vadd.s32 %v142, 1
    %v420 = vmul.u32 %v419, 8
    %vm421 = vcmp.lt.s32.totalorder %v144, %v420
    %vm422 = vcmp.lt.s32.totalorder %v415, %v420
    %vm423 = vmand %vm417, %vm421
    %vm424 = vmand %vm418, %vm422
    %v425 = vsel %vm423, 1.0, 0.0
    %v426 = vsel %vm424, 1.0, 0.0
    %vm427 = vcmask 15360
    %v429 = vsel %vm427, %v425, 0
    %v432 = vsel %vm427, %v426, 0
    %vm434 = vcmask 1041408
    %v436 = vsel %vm434, %v414, 0
    %438 = vmatprep.subr.mxu0 0.0
    %439 = vmatpush1.msra.mxu0 %v436
    %440 = vmatprep.subr.mxu0 0.0
    %441 = vmatpush1.msra.mxu0 0.0
    %442 = vmatprep.subr.mxu0 0.0
    %443 = vmatpush1.msra.mxu0 0.0
    %444 = vmatprep.subr.mxu0 0.0
    %445 = vmatpush1.msra.mxu0 0.0
    %446 = vmatprep.subr.mxu0 0.0
    %447 = vmatpush1.msra.mxu0 0.0
    %448 = vmatprep.subr.mxu0 0.0
    %449 = vmatpush1.msra.mxu0 0.0
    %450 = vmatprep.subr.mxu0 0.0
    %451 = vmatpush1.msra.mxu0 0.0
    %452 = vmatprep.subr.mxu0 0.0
    %453 = vmatpush1.msra.mxu0 0.0
    %454 = vmatprep.subr.mxu0 0.0
    %455 = vmatpush1.msra.mxu0 0.0
    %456 = vmatprep.subr.mxu0 0.0
    %457 = vmatpush1.msra.mxu0 0.0
    %458 = vmatprep.subr.mxu0 0.0
    %459 = vmatpush1.msra.mxu0 0.0
    %460 = vmatprep.subr.mxu0 0.0
    %461 = vmatpush1.msra.mxu0 0.0
    %462 = vmatprep.subr.mxu0 0.0
    %463 = vmatpush1.msra.mxu0 0.0
    %464 = vmatprep.subr.mxu0 0.0
    %465 = vmatpush1.msra.mxu0 0.0
    %466 = vmatprep.subr.mxu0 0.0
    %467 = vmatpush1.msra.mxu0 0.0
    %468 = vmatprep.subr.mxu0 0.0
    %469 = vmatpush1.msra.mxu0 0.0
    %470 = vmatprep.subr.mxu0 0.0
    %471 = vmatpush1.msra.mxu0 0.0
    %472 = vmatprep.subr.mxu0 0.0
    %473 = vmatpush1.msra.mxu0 0.0
    %474 = vmatprep.subr.mxu0 0.0
    %475 = vmatpush1.msra.mxu0 0.0
    %476 = vmatprep.subr.mxu0 0.0
    %477 = vmatpush1.msra.mxu0 0.0
    %478 = vmatprep.subr.mxu0 0.0
    %479 = vmatpush1.msra.mxu0 0.0
    %480 = vmatprep.subr.mxu0 0.0
    %481 = vmatpush1.msra.mxu0 0.0
    %482 = vmatprep.subr.mxu0 0.0
    %483 = vmatpush1.msra.mxu0 0.0
    %484 = vmatprep.subr.mxu0 0.0
    %485 = vmatpush1.msra.mxu0 0.0
    %486 = vmatprep.subr.mxu0 0.0
    %487 = vmatpush1.msra.mxu0 0.0
    %488 = vmatprep.subr.mxu0 0.0
    %489 = vmatpush1.msra.mxu0 0.0
    %490 = vmatprep.subr.mxu0 0.0
    %491 = vmatpush1.msra.mxu0 0.0
    %492 = vmatprep.subr.mxu0 0.0
    %493 = vmatpush1.msra.mxu0 0.0
    %494 = vmatprep.subr.mxu0 0.0
    %495 = vmatpush1.msra.mxu0 0.0
    %496 = vmatprep.subr.mxu0 0.0
    %497 = vmatpush1.msra.mxu0 0.0
    %498 = vmatprep.subr.mxu0 0.0
    %499 = vmatpush1.msra.mxu0 0.0
    %500 = vmatprep.subr.mxu0 0.0
    %501 = vmatpush1.msra.mxu0 0.0
    %502 = vmatprep.mubr.f32.mxu0 0.0
    %503 = vmatmul.mubr.f32.gmra.mrb[0].mxu0 %v429
    %v504 = vpop.f32.mrb[0].mxu0
    %v505 = vadd.f32 0.0, %v504
    %v506 = vpop.f32.mrb[0].mxu0
    %507 = vmatprep.mubr.f32.mxu0 0.0
    %508 = vmatmul.mubr.f32.gmra.mrb[0].mxu0 %v432
    %v509 = vpop.f32.mrb[0].mxu0
    %v510 = vadd.f32 0.0, %v509
    %v511 = vpop.f32.mrb[0].mxu0
    %512 = vdwg.mxu0
    %v513 = vmul.f32 %v133, %v505
    %v514 = vmul.f32 %v138, %v510
    %515 = vst [vmem:[#allocation5] sm:$0xff] %v513
    %516 = vst [vmem:[#allocation5 + $0x8] sm:$0xff] %v514
    // Predicated region
    $region34: #{tpu_custom_call.1} parent=1 // pred_check
      _
    $region35: #{tpu_custom_call.1} parent=1 // pred_check_branch
      %518 = sbr.rel (0) target = $region37
    $region36: #{tpu_custom_call.1} parent=1 // pred_region
      %s520 = ssub.s32 256, 256
      %521 = vsyncadd [#allocation4], %s520
      %s522 = sshll.u32 [#allocation5], 4
      %s523 = int_to_ptr.vmem [resolvable:$true] %s522
      %528 = dma.vmem_to_hbm [thread:$0]  %s523, 256, %s7, [#allocation4], 128, 128, 8
    $region37: #{tpu_custom_call.1} parent=1 // pred_fallthru
      _
    // Predicated region
    $region38: #{tpu_custom_call.1} parent=1 // pred_check
      _
    $region39: #{tpu_custom_call.1} parent=1 // pred_check_branch
      %530 = sbr.rel (0) target = $region41
    $region40: #{tpu_custom_call.1} parent=1 // pred_region
      %531 = dma.done [#allocation4], 256
    $region41: #{tpu_custom_call.1} parent=1 // pred_fallthru
      _
    %532 = vsyncpa [#allocation3], 1
    %533 = vsyncpa [#allocation4], 1

</llo_original>
